<compile_context>
chip_gen: v6e
topology: v6e:2x2x1
jax: 0.10.0
libtpu: 0.0.40
codegen_flags: <defaults>
</compile_context>

<pallas_src>
import functools

import jax
import jax.numpy as jnp
from jax.experimental import pallas as pl
from jax.experimental.pallas import tpu as pltpu

LAT_W = 128  # lane-dense width of the packed (z_mean | z_var | z | pad) output slab


def _softplus(x):
    # numerically stable softplus, same as F.softplus(x) with default beta=1
    return jnp.maximum(x, 0.0) + jnp.log1p(jnp.exp(-jnp.abs(x)))


def _vae_kernel(
    x_ref, eps_ref,
    w_e0_ref, b_e0_ref, w_e1_ref, b_e1_ref,
    w_mv_ref, b_mv_ref,
    w_d0_ref, b_d0_ref, w_d1_ref, b_d1_ref,
    w_lg_ref, b_lg_ref,
    lat_ref, xrec_ref,
    *, z_dim,
):
    relu = lambda v: jnp.maximum(v, 0.0)
    bf16 = jnp.bfloat16
    dot = functools.partial(jnp.dot, preferred_element_type=jnp.float32)

    # x arrives as f32 straight from HBM; the bf16 cast runs on the VPU and hides
    # under the MXU instead of costing an extra HBM round trip in the wrapper.
    x = x_ref[...].astype(bf16)                                      # [TB, 768] bf16

    # ---- encode (bf16 MXU matmuls, f32 accumulate/epilogue) ----
    h0 = relu(dot(x, w_e0_ref[...]) + b_e0_ref[...])                 # [TB, 2h] f32
    h1 = relu(dot(h0.astype(bf16), w_e1_ref[...]) + b_e1_ref[...])   # [TB, h]  f32

    # fused mean / (pre-softplus) var projection: single matmul for both heads
    mv = dot(h1.astype(bf16), w_mv_ref[...]) + b_mv_ref[...]         # [TB, 2z] f32
    z_mean = mv[:, :z_dim]
    z_var = _softplus(mv[:, z_dim:])    # scale of Normal(z_mean, scale=z_var), as in PyTorch

    # ---- reparameterize: Normal(z_mean, scale=z_var).rsample() ----
    # NOTE: when B % TB != 0 the padded tail rows flow through exp/softplus on
    # block padding; those rows are discarded, fine unless debug checks are on.
    z = z_mean + z_var * eps_ref[...]                                # [TB, z] f32

    # ---- decode ----
    d0 = relu(dot(z.astype(bf16), w_d0_ref[...]) + b_d0_ref[...])    # [TB, h]
    d1 = relu(dot(d0.astype(bf16), w_d1_ref[...]) + b_d1_ref[...])   # [TB, 2h]
    x_rec = dot(d1.astype(bf16), w_lg_ref[...]) + b_lg_ref[...]      # [TB, 768]

    # lane-dense packed latent output: one full-width (128-lane) store instead of
    # three masked 8-lane stores.
    pieces = [z_mean, z_var, z]
    pad_w = LAT_W - 3 * z_dim
    if pad_w > 0:  # guard zero-width pad operand
        pieces.append(jnp.zeros((z_mean.shape[0], pad_w), jnp.float32))
    lat_ref[...] = jnp.concatenate(pieces, axis=-1)
    xrec_ref[...] = x_rec.astype(xrec_ref.dtype)


def prepare_params(params):
    """One-time parameter prep (call OUTSIDE the step, reuse result every call):
    fuse the mean/var heads into a single [h, 2z] matmul, cast weights to bf16
    (MXU operands) and keep biases f32 (epilogue adds)."""
    bf16 = jnp.bfloat16
    f32 = jnp.float32
    w_mv = jnp.concatenate([params["w_mu"], params["w_var"]], axis=1).astype(bf16)
    b_mv = jnp.concatenate([params["b_mu"], params["b_var"]], axis=1).astype(f32)
    return (
        params["w_e0"].astype(bf16), params["b_e0"].astype(f32),
        params["w_e1"].astype(bf16), params["b_e1"].astype(f32),
        w_mv, b_mv,
        params["w_d0"].astype(bf16), params["b_d0"].astype(f32),
        params["w_d1"].astype(bf16), params["b_d1"].astype(f32),
        params["w_lg"].astype(bf16), params["b_lg"].astype(f32),
    )


def _choose_tb(batch, tb_max):
    """Largest batch tile <= tb_max, but keep >= 2 grid steps when the batch is
    big enough so v7x's ("parallel",) batch axis can shard across both TCs."""
    tb = min(tb_max, batch)
    if pl.cdiv(batch, tb) == 1 and batch > 128:
        tb = ((-(-batch // 2)) + 7) // 8 * 8  # ceil(B/2), rounded to sublane mult
    return tb


def vae_forward(x, eps, prepared, *, tb=1024, xrec_dtype=jnp.float32):
    """Fused ModelVAE forward. x: [B, 768] f32, eps: [B, z] f32,
    prepared: output of prepare_params(). Returns (z_mean, z_var, z, x_rec)."""
    B, IN = x.shape
    (w_e0, b_e0, w_e1, b_e1, w_mv, b_mv,
     w_d0, b_d0, w_d1, b_d1, w_lg, b_lg) = prepared
    z_dim = w_mv.shape[1] // 2
    h_dim = w_e1.shape[1]
    h2 = w_e0.shape[1]
    assert 3 * z_dim <= LAT_W, "latent slab packing assumes 3*z_dim <= 128"

    ordered = list(prepared)

    TB = _choose_tb(B, tb)
    grid = (pl.cdiv(B, TB),)

    def batch_map(i):
        return (i, 0)

    def resident_map(i):
        return (0, 0)

    in_specs = [
        pl.BlockSpec((TB, IN), batch_map),       # x (f32, cast in-kernel)
        pl.BlockSpec((TB, z_dim), batch_map),    # eps (f32)
    ] + [
        # weights/biases never change block index -> single-buffered, VMEM-resident
        pl.BlockSpec(w.shape, resident_map, pipeline_mode=pl.Buffered(1))
        for w in ordered
    ]

    out_specs = (
        pl.BlockSpec((TB, LAT_W), batch_map),    # packed (z_mean|z_var|z|pad)
        pl.BlockSpec((TB, IN), batch_map),       # x_rec
    )
    out_shapes = (
        jax.ShapeDtypeStruct((B, LAT_W), jnp.float32),
        jax.ShapeDtypeStruct((B, IN), xrec_dtype),
    )

    # ---- advisory cost estimate ----
    flops = 2 * B * (IN * h2 + h2 * h_dim + h_dim * 2 * z_dim
                     + z_dim * h_dim + h_dim * h2 + h2 * IN)
    weight_bytes = sum(int(w.size) * w.dtype.itemsize for w in ordered)
    xrec_itemsize = jnp.dtype(xrec_dtype).itemsize
    bytes_accessed = (
        B * IN * 4 + B * z_dim * 4 + weight_bytes
        + B * LAT_W * 4 + B * IN * xrec_itemsize
    )
    cost = pl.CostEstimate(flops=flops,
                           transcendentals=2 * B * z_dim,
                           bytes_accessed=bytes_accessed)

    # ---- scoped-VMEM budget (only raise when the default would be too small;
    #      cap at 64 MiB so the same answer is safe on v7x's smaller VMEM) ----
    blk_row_bytes = IN * 4 + z_dim * 4 + LAT_W * 4 + IN * xrec_itemsize
    interm_row_bytes = (4 * (h2 + h_dim + 2 * z_dim) + IN) * 4  # rough f32 live values
    est_vmem = 2 * TB * blk_row_bytes + weight_bytes + TB * interm_row_bytes
    vmem_limit = None
    if est_vmem > (12 << 20):  # v5e default scoped budget is 16 MiB
        vmem_limit = int(min(64 << 20, max(32 << 20, 2 * est_vmem)))

    lat, x_rec = pl.pallas_call(
        functools.partial(_vae_kernel, z_dim=z_dim),
        out_shape=out_shapes,
        grid=grid,
        in_specs=in_specs,
        out_specs=out_specs,
        compiler_params=pltpu.CompilerParams(
            dimension_semantics=("parallel",),   # batch axis shards across v7x TCs
            vmem_limit_bytes=vmem_limit),
        cost_estimate=cost,
    )(x, eps, *ordered)

    z_mean = lat[:, :z_dim]
    z_var = lat[:, z_dim:2 * z_dim]
    z = lat[:, 2 * z_dim:3 * z_dim]
    return z_mean, z_var, z, x_rec


def init_params(key, h_dim, z_dim):
    """Deterministic init mimicking nn.Linear default (uniform(-1/sqrt(fan_in), +))."""
    def linear(key, fan_in, fan_out):
        kw, kb = jax.random.split(key)
        bound = 1.0 / jnp.sqrt(fan_in)
        w = jax.random.uniform(kw, (fan_in, fan_out), jnp.float32, -bound, bound)
        # biases stored as [1, fan_out] so they broadcast cleanly in the kernel
        b = jax.random.uniform(kb, (1, fan_out), jnp.float32, -bound, bound)
        return w, b

    keys = jax.random.split(key, 7)
    h2 = h_dim * 2
    p = {}
    p["w_e0"], p["b_e0"] = linear(keys[0], 768, h2)
    p["w_e1"], p["b_e1"] = linear(keys[1], h2, h_dim)
    p["w_mu"], p["b_mu"] = linear(keys[2], h_dim, z_dim)
    p["w_var"], p["b_var"] = linear(keys[3], h_dim, z_dim)
    p["w_d0"], p["b_d0"] = linear(keys[4], z_dim, h_dim)
    p["w_d1"], p["b_d1"] = linear(keys[5], h_dim, h2)
    p["w_lg"], p["b_lg"] = linear(keys[6], h2, 768)
    return p


def vae_forward_ref(x, eps, p, *, matmul_dtype=jnp.float32):
    """Pure-JAX reference. With matmul_dtype=bfloat16 it mirrors the kernel's
    bf16-operand / f32-accumulation matmuls exactly."""
    relu = lambda v: jnp.maximum(v, 0.0)

    def mm(a, w):
        return jnp.dot(a.astype(matmul_dtype), w.astype(matmul_dtype),
                       preferred_element_type=jnp.float32)

    h0 = relu(mm(x, p["w_e0"]) + p["b_e0"])
    h1 = relu(mm(h0, p["w_e1"]) + p["b_e1"])
    z_mean = mm(h1, p["w_mu"]) + p["b_mu"]
    z_var = jax.nn.softplus(mm(h1, p["w_var"]) + p["b_var"])
    z = z_mean + z_var * eps
    d0 = relu(mm(z, p["w_d0"]) + p["b_d0"])
    d1 = relu(mm(d0, p["w_d1"]) + p["b_d1"])
    x_rec = mm(d1, p["w_lg"]) + p["b_lg"]
    return z_mean, z_var, z, x_rec


if __name__ == "__main__":
    B, H_DIM, Z_DIM = 8, 32, 8

    key = jax.random.PRNGKey(0)
    k_params, k_x, k_eps = jax.random.split(key, 3)

    params = init_params(k_params, H_DIM, Z_DIM)
    x = jax.random.normal(k_x, (B, 768), jnp.float32)
    eps = jax.random.normal(k_eps, (B, Z_DIM), jnp.float32)  # rsample noise

    # one-time weight prep (fused mu/var head, bf16 casts) hoisted out of the step
    prepared = jax.tree_util.tree_map(jnp.asarray, prepare_params(params))

    fwd = jax.jit(functools.partial(vae_forward, tb=1024))
    z_mean, z_var, z, x_rec = jax.block_until_ready(fwd(x, eps, prepared))

    # correctness: compare against a pure-JAX reference using the same
    # bf16-operand / f32-accumulation matmul precision as the kernel.
    ref = vae_forward_ref(x, eps, params, matmul_dtype=jnp.bfloat16)
    names = ("z_mean", "z_var", "z", "x_")
    for name, got, want in zip(names, (z_mean, z_var, z, x_rec), ref):
        assert jnp.allclose(got, want, atol=1e-3, rtol=1e-3), f"mismatch in {name}"

    print("KERNEL_OK")
</pallas_src>

<mosaic_0001>
module attributes {stable_mosaic.version = 11 : i64} {
  func.func @_vae_kernel(%arg0: i32, %arg1: memref<8x768xf32, #tpu.memory_space<vmem>>, %arg2: memref<8x8xf32, #tpu.memory_space<vmem>>, %arg3: memref<768x64xbf16, #tpu.memory_space<vmem>>, %arg4: memref<1x64xf32, #tpu.memory_space<vmem>>, %arg5: memref<64x32xbf16, #tpu.memory_space<vmem>>, %arg6: memref<1x32xf32, #tpu.memory_space<vmem>>, %arg7: memref<32x16xbf16, #tpu.memory_space<vmem>>, %arg8: memref<1x16xf32, #tpu.memory_space<vmem>>, %arg9: memref<8x32xbf16, #tpu.memory_space<vmem>>, %arg10: memref<1x32xf32, #tpu.memory_space<vmem>>, %arg11: memref<32x64xbf16, #tpu.memory_space<vmem>>, %arg12: memref<1x64xf32, #tpu.memory_space<vmem>>, %arg13: memref<64x768xbf16, #tpu.memory_space<vmem>>, %arg14: memref<1x768xf32, #tpu.memory_space<vmem>>, %arg15: memref<8x128xf32, #tpu.memory_space<vmem>>, %arg16: memref<8x768xf32, #tpu.memory_space<vmem>>) attributes {dimension_semantics = [#tpu.dimension_semantics<parallel>], iteration_bounds = array<i64: 1>, scalar_prefetch = 0 : i64, scratch_operands = 0 : i64, tpu.core_type = #tpu.core_type<tc>, window_params = [{transform_indices = @transform_0, window_bounds = array<i64: 8, 768>}, {transform_indices = @transform_1, window_bounds = array<i64: 8, 8>}, {pipeline_mode = #tpu.pipeline_mode<synchronous>, transform_indices = @transform_2, window_bounds = array<i64: 768, 64>}, {pipeline_mode = #tpu.pipeline_mode<synchronous>, transform_indices = @transform_3, window_bounds = array<i64: 1, 64>}, {pipeline_mode = #tpu.pipeline_mode<synchronous>, transform_indices = @transform_4, window_bounds = array<i64: 64, 32>}, {pipeline_mode = #tpu.pipeline_mode<synchronous>, transform_indices = @transform_5, window_bounds = array<i64: 1, 32>}, {pipeline_mode = #tpu.pipeline_mode<synchronous>, transform_indices = @transform_6, window_bounds = array<i64: 32, 16>}, {pipeline_mode = #tpu.pipeline_mode<synchronous>, transform_indices = @transform_7, window_bounds = array<i64: 1, 16>}, {pipeline_mode = #tpu.pipeline_mode<synchronous>, transform_indices = @transform_8, window_bounds = array<i64: 8, 32>}, {pipeline_mode = #tpu.pipeline_mode<synchronous>, transform_indices = @transform_9, window_bounds = array<i64: 1, 32>}, {pipeline_mode = #tpu.pipeline_mode<synchronous>, transform_indices = @transform_10, window_bounds = array<i64: 32, 64>}, {pipeline_mode = #tpu.pipeline_mode<synchronous>, transform_indices = @transform_11, window_bounds = array<i64: 1, 64>}, {pipeline_mode = #tpu.pipeline_mode<synchronous>, transform_indices = @transform_12, window_bounds = array<i64: 64, 768>}, {pipeline_mode = #tpu.pipeline_mode<synchronous>, transform_indices = @transform_13, window_bounds = array<i64: 1, 768>}, {transform_indices = @transform_14, window_bounds = array<i64: 8, 128>}, {transform_indices = @transform_15, window_bounds = array<i64: 8, 768>}]} {
    %c0 = arith.constant 0 : index
    %c0_0 = arith.constant 0 : index
    %0 = vector.load %arg1[%c0, %c0_0] : memref<8x768xf32, #tpu.memory_space<vmem>>, vector<8x768xf32>
    %1 = arith.truncf %0 : vector<8x768xf32> to vector<8x768xbf16>
    %c0_1 = arith.constant 0 : index
    %c0_2 = arith.constant 0 : index
    %2 = vector.load %arg3[%c0_1, %c0_2] : memref<768x64xbf16, #tpu.memory_space<vmem>>, vector<768x64xbf16>
    %cst = arith.constant dense<0.000000e+00> : vector<8x64xf32>
    %3 = tpu.matmul %1, %2, %cst {dimension_numbers = #tpu.dot_dimension_numbers<[1], [0], [0], [1], [0, 0, 1, 1], [], []>} : vector<8x768xbf16>, vector<768x64xbf16>, vector<8x64xf32> -> vector<8x64xf32>
    %c0_3 = arith.constant 0 : index
    %c0_4 = arith.constant 0 : index
    %4 = vector.load %arg4[%c0_3, %c0_4] : memref<1x64xf32, #tpu.memory_space<vmem>>, vector<1x64xf32>
    %5 = vector.broadcast %4 : vector<1x64xf32> to vector<8x64xf32>
    %6 = arith.addf %3, %5 : vector<8x64xf32>
    %cst_5 = arith.constant 0.000000e+00 : f32
    %7 = vector.broadcast %cst_5 : f32 to vector<8x64xf32>
    %8 = arith.maximumf %6, %7 : vector<8x64xf32>
    %9 = arith.truncf %8 : vector<8x64xf32> to vector<8x64xbf16>
    %c0_6 = arith.constant 0 : index
    %c0_7 = arith.constant 0 : index
    %10 = vector.load %arg5[%c0_6, %c0_7] : memref<64x32xbf16, #tpu.memory_space<vmem>>, vector<64x32xbf16>
    %cst_8 = arith.constant dense<0.000000e+00> : vector<8x32xf32>
    %11 = tpu.matmul %9, %10, %cst_8 {dimension_numbers = #tpu.dot_dimension_numbers<[1], [0], [0], [1], [0, 0, 1, 1], [], []>} : vector<8x64xbf16>, vector<64x32xbf16>, vector<8x32xf32> -> vector<8x32xf32>
    %c0_9 = arith.constant 0 : index
    %c0_10 = arith.constant 0 : index
    %12 = vector.load %arg6[%c0_9, %c0_10] : memref<1x32xf32, #tpu.memory_space<vmem>>, vector<1x32xf32>
    %13 = vector.broadcast %12 : vector<1x32xf32> to vector<8x32xf32>
    %14 = arith.addf %11, %13 : vector<8x32xf32>
    %cst_11 = arith.constant 0.000000e+00 : f32
    %15 = vector.broadcast %cst_11 : f32 to vector<8x32xf32>
    %16 = arith.maximumf %14, %15 : vector<8x32xf32>
    %17 = arith.truncf %16 : vector<8x32xf32> to vector<8x32xbf16>
    %c0_12 = arith.constant 0 : index
    %c0_13 = arith.constant 0 : index
    %18 = vector.load %arg7[%c0_12, %c0_13] : memref<32x16xbf16, #tpu.memory_space<vmem>>, vector<32x16xbf16>
    %cst_14 = arith.constant dense<0.000000e+00> : vector<8x16xf32>
    %19 = tpu.matmul %17, %18, %cst_14 {dimension_numbers = #tpu.dot_dimension_numbers<[1], [0], [0], [1], [0, 0, 1, 1], [], []>} : vector<8x32xbf16>, vector<32x16xbf16>, vector<8x16xf32> -> vector<8x16xf32>
    %c0_15 = arith.constant 0 : index
    %c0_16 = arith.constant 0 : index
    %20 = vector.load %arg8[%c0_15, %c0_16] : memref<1x16xf32, #tpu.memory_space<vmem>>, vector<1x16xf32>
    %21 = vector.broadcast %20 : vector<1x16xf32> to vector<8x16xf32>
    %22 = arith.addf %19, %21 : vector<8x16xf32>
    %23 = vector.extract_strided_slice %22 {offsets = [0, 0], sizes = [8, 8], strides = [1, 1]} : vector<8x16xf32> to vector<8x8xf32>
    %24 = vector.extract_strided_slice %22 {offsets = [0, 8], sizes = [8, 8], strides = [1, 1]} : vector<8x16xf32> to vector<8x8xf32>
    %cst_17 = arith.constant 0.000000e+00 : f32
    %25 = vector.broadcast %cst_17 : f32 to vector<8x8xf32>
    %26 = arith.maximumf %24, %25 : vector<8x8xf32>
    %27 = math.absf %24 : vector<8x8xf32>
    %cst_18 = arith.constant 0.000000e+00 : f32
    %28 = vector.broadcast %cst_18 : f32 to vector<8x8xf32>
    %29 = arith.subf %28, %27 : vector<8x8xf32>
    %30 = math.exp %29 : vector<8x8xf32>
    %31 = math.log1p %30 : vector<8x8xf32>
    %32 = arith.addf %26, %31 : vector<8x8xf32>
    %c0_19 = arith.constant 0 : index
    %c0_20 = arith.constant 0 : index
    %33 = vector.load %arg2[%c0_19, %c0_20] : memref<8x8xf32, #tpu.memory_space<vmem>>, vector<8x8xf32>
    %34 = arith.mulf %32, %33 : vector<8x8xf32>
    %35 = arith.addf %23, %34 : vector<8x8xf32>
    %36 = arith.truncf %35 : vector<8x8xf32> to vector<8x8xbf16>
    %c0_21 = arith.constant 0 : index
    %c0_22 = arith.constant 0 : index
    %37 = vector.load %arg9[%c0_21, %c0_22] : memref<8x32xbf16, #tpu.memory_space<vmem>>, vector<8x32xbf16>
    %cst_23 = arith.constant dense<0.000000e+00> : vector<8x32xf32>
    %38 = tpu.matmul %36, %37, %cst_23 {dimension_numbers = #tpu.dot_dimension_numbers<[1], [0], [0], [1], [0, 0, 1, 1], [], []>} : vector<8x8xbf16>, vector<8x32xbf16>, vector<8x32xf32> -> vector<8x32xf32>
    %c0_24 = arith.constant 0 : index
    %c0_25 = arith.constant 0 : index
    %39 = vector.load %arg10[%c0_24, %c0_25] : memref<1x32xf32, #tpu.memory_space<vmem>>, vector<1x32xf32>
    %40 = vector.broadcast %39 : vector<1x32xf32> to vector<8x32xf32>
    %41 = arith.addf %38, %40 : vector<8x32xf32>
    %cst_26 = arith.constant 0.000000e+00 : f32
    %42 = vector.broadcast %cst_26 : f32 to vector<8x32xf32>
    %43 = arith.maximumf %41, %42 : vector<8x32xf32>
    %44 = arith.truncf %43 : vector<8x32xf32> to vector<8x32xbf16>
    %c0_27 = arith.constant 0 : index
    %c0_28 = arith.constant 0 : index
    %45 = vector.load %arg11[%c0_27, %c0_28] : memref<32x64xbf16, #tpu.memory_space<vmem>>, vector<32x64xbf16>
    %cst_29 = arith.constant dense<0.000000e+00> : vector<8x64xf32>
    %46 = tpu.matmul %44, %45, %cst_29 {dimension_numbers = #tpu.dot_dimension_numbers<[1], [0], [0], [1], [0, 0, 1, 1], [], []>} : vector<8x32xbf16>, vector<32x64xbf16>, vector<8x64xf32> -> vector<8x64xf32>
    %c0_30 = arith.constant 0 : index
    %c0_31 = arith.constant 0 : index
    %47 = vector.load %arg12[%c0_30, %c0_31] : memref<1x64xf32, #tpu.memory_space<vmem>>, vector<1x64xf32>
    %48 = vector.broadcast %47 : vector<1x64xf32> to vector<8x64xf32>
    %49 = arith.addf %46, %48 : vector<8x64xf32>
    %cst_32 = arith.constant 0.000000e+00 : f32
    %50 = vector.broadcast %cst_32 : f32 to vector<8x64xf32>
    %51 = arith.maximumf %49, %50 : vector<8x64xf32>
    %52 = arith.truncf %51 : vector<8x64xf32> to vector<8x64xbf16>
    %c0_33 = arith.constant 0 : index
    %c0_34 = arith.constant 0 : index
    %53 = vector.load %arg13[%c0_33, %c0_34] : memref<64x768xbf16, #tpu.memory_space<vmem>>, vector<64x768xbf16>
    %cst_35 = arith.constant dense<0.000000e+00> : vector<8x768xf32>
    %54 = tpu.matmul %52, %53, %cst_35 {dimension_numbers = #tpu.dot_dimension_numbers<[1], [0], [0], [1], [0, 0, 1, 1], [], []>} : vector<8x64xbf16>, vector<64x768xbf16>, vector<8x768xf32> -> vector<8x768xf32>
    %c0_36 = arith.constant 0 : index
    %c0_37 = arith.constant 0 : index
    %55 = vector.load %arg14[%c0_36, %c0_37] : memref<1x768xf32, #tpu.memory_space<vmem>>, vector<1x768xf32>
    %56 = vector.broadcast %55 : vector<1x768xf32> to vector<8x768xf32>
    %57 = arith.addf %54, %56 : vector<8x768xf32>
    %cst_38 = arith.constant 0.000000e+00 : f32
    %58 = vector.broadcast %cst_38 : f32 to vector<8x104xf32>
    %59 = tpu.concatenate %23, %32, %35, %58 in 1 : vector<8x8xf32>, vector<8x8xf32>, vector<8x8xf32>, vector<8x104xf32> -> vector<8x128xf32>
    %c0_39 = arith.constant 0 : index
    %c0_40 = arith.constant 0 : index
    %60 = vector.load %arg15[%c0_39, %c0_40] : memref<8x128xf32, #tpu.memory_space<vmem>>, vector<8x128xf32>
    tpu.vector_store %arg15[%c0_39, %c0_40], %59 {strides = array<i32>} : memref<8x128xf32, #tpu.memory_space<vmem>>, vector<8x128xf32>,
    %c0_41 = arith.constant 0 : index
    %c0_42 = arith.constant 0 : index
    %61 = vector.load %arg16[%c0_41, %c0_42] : memref<8x768xf32, #tpu.memory_space<vmem>>, vector<8x768xf32>
    tpu.vector_store %arg16[%c0_41, %c0_42], %57 {strides = array<i32>} : memref<8x768xf32, #tpu.memory_space<vmem>>, vector<8x768xf32>,
    return
  }
  func.func @transform_0(%arg0: i32) -> (i32, i32) {
    %c0_i32 = arith.constant 0 : i32
    %c0_i32_0 = arith.constant 0 : i32
    return %arg0, %c0_i32 : i32, i32
  }
  func.func @transform_1(%arg0: i32) -> (i32, i32) {
    %c0_i32 = arith.constant 0 : i32
    %c0_i32_0 = arith.constant 0 : i32
    return %arg0, %c0_i32 : i32, i32
  }
  func.func @transform_2(%arg0: i32) -> (i32, i32) {
    %c0_i32 = arith.constant 0 : i32
    %c0_i32_0 = arith.constant 0 : i32
    %c0_i32_1 = arith.constant 0 : i32
    return %c0_i32, %c0_i32_0 : i32, i32
  }
  func.func @transform_3(%arg0: i32) -> (i32, i32) {
    %c0_i32 = arith.constant 0 : i32
    %c0_i32_0 = arith.constant 0 : i32
    %c0_i32_1 = arith.constant 0 : i32
    return %c0_i32, %c0_i32_0 : i32, i32
  }
  func.func @transform_4(%arg0: i32) -> (i32, i32) {
    %c0_i32 = arith.constant 0 : i32
    %c0_i32_0 = arith.constant 0 : i32
    %c0_i32_1 = arith.constant 0 : i32
    return %c0_i32, %c0_i32_0 : i32, i32
  }
  func.func @transform_5(%arg0: i32) -> (i32, i32) {
    %c0_i32 = arith.constant 0 : i32
    %c0_i32_0 = arith.constant 0 : i32
    %c0_i32_1 = arith.constant 0 : i32
    return %c0_i32, %c0_i32_0 : i32, i32
  }
  func.func @transform_6(%arg0: i32) -> (i32, i32) {
    %c0_i32 = arith.constant 0 : i32
    %c0_i32_0 = arith.constant 0 : i32
    %c0_i32_1 = arith.constant 0 : i32
    return %c0_i32, %c0_i32_0 : i32, i32
  }
  func.func @transform_7(%arg0: i32) -> (i32, i32) {
    %c0_i32 = arith.constant 0 : i32
    %c0_i32_0 = arith.constant 0 : i32
    %c0_i32_1 = arith.constant 0 : i32
    return %c0_i32, %c0_i32_0 : i32, i32
  }
  func.func @transform_8(%arg0: i32) -> (i32, i32) {
    %c0_i32 = arith.constant 0 : i32
    %c0_i32_0 = arith.constant 0 : i32
    %c0_i32_1 = arith.constant 0 : i32
    return %c0_i32, %c0_i32_0 : i32, i32
  }
  func.func @transform_9(%arg0: i32) -> (i32, i32) {
    %c0_i32 = arith.constant 0 : i32
    %c0_i32_0 = arith.constant 0 : i32
    %c0_i32_1 = arith.constant 0 : i32
    return %c0_i32, %c0_i32_0 : i32, i32
  }
  func.func @transform_10(%arg0: i32) -> (i32, i32) {
    %c0_i32 = arith.constant 0 : i32
    %c0_i32_0 = arith.constant 0 : i32
    %c0_i32_1 = arith.constant 0 : i32
    return %c0_i32, %c0_i32_0 : i32, i32
  }
  func.func @transform_11(%arg0: i32) -> (i32, i32) {
    %c0_i32 = arith.constant 0 : i32
    %c0_i32_0 = arith.constant 0 : i32
    %c0_i32_1 = arith.constant 0 : i32
    return %c0_i32, %c0_i32_0 : i32, i32
  }
  func.func @transform_12(%arg0: i32) -> (i32, i32) {
    %c0_i32 = arith.constant 0 : i32
    %c0_i32_0 = arith.constant 0 : i32
    %c0_i32_1 = arith.constant 0 : i32
    return %c0_i32, %c0_i32_0 : i32, i32
  }
  func.func @transform_13(%arg0: i32) -> (i32, i32) {
    %c0_i32 = arith.constant 0 : i32
    %c0_i32_0 = arith.constant 0 : i32
    %c0_i32_1 = arith.constant 0 : i32
    return %c0_i32, %c0_i32_0 : i32, i32
  }
  func.func @transform_14(%arg0: i32) -> (i32, i32) {
    %c0_i32 = arith.constant 0 : i32
    %c0_i32_0 = arith.constant 0 : i32
    return %arg0, %c0_i32 : i32, i32
  }
  func.func @transform_15(%arg0: i32) -> (i32, i32) {
    %c0_i32 = arith.constant 0 : i32
    %c0_i32_0 = arith.constant 0 : i32
    return %arg0, %c0_i32 : i32, i32
  }
}

</mosaic_0001>

<llo_original>
// kernel: vae_forward.1
$region0: #{vae_forward.1}
  #allocation0 [shape = 'u32[]', space=smem, size = 0x4, offset = 0x4, fixed_abs, tag = 'smem constant byte address 0x4 - core index']
  #allocation1 [shape = 'u32[144,128]{1,0:T(1,128)}', space=vmem, size = 0x12000, scoped, tag = 'internal scratch']
  %s0 = inlined_call_operand.vmem [shape: f32[8,768], index: 0, kind: input, shape index: {}]
  %s1 = inlined_call_operand.vmem [shape: f32[8,8], index: 1, kind: input, shape index: {}]
  %s2 = inlined_call_operand.vmem [shape: bf16[768,64], index: 2, kind: input, shape index: {}]
  %s3 = inlined_call_operand.vmem [shape: f32[1,64], index: 3, kind: input, shape index: {}]
  %s4 = inlined_call_operand.vmem [shape: bf16[64,32], index: 4, kind: input, shape index: {}]
  %s5 = inlined_call_operand.vmem [shape: f32[1,32], index: 5, kind: input, shape index: {}]
  %s6 = inlined_call_operand.vmem [shape: bf16[32,16], index: 6, kind: input, shape index: {}]
  %s7 = inlined_call_operand.vmem [shape: f32[1,16], index: 7, kind: input, shape index: {}]
  %s8 = inlined_call_operand.vmem [shape: bf16[8,32], index: 8, kind: input, shape index: {}]
  %s9 = inlined_call_operand.vmem [shape: f32[1,32], index: 9, kind: input, shape index: {}]
  %s10 = inlined_call_operand.vmem [shape: bf16[32,64], index: 10, kind: input, shape index: {}]
  %s11 = inlined_call_operand.vmem [shape: f32[1,64], index: 11, kind: input, shape index: {}]
  %s12 = inlined_call_operand.vmem [shape: bf16[64,768], index: 12, kind: input, shape index: {}]
  %s13 = inlined_call_operand.vmem [shape: f32[1,768], index: 13, kind: input, shape index: {}]
  %s14 = inlined_call_operand.vmem [shape: f32[8,128], index: 14, kind: output, shape index: {0}]
  %s15 = inlined_call_operand.hbm [shape: f32[8,768], index: 15, kind: output, shape index: {1}]
  %16 = xla_tuple %s14, %s15
  %s17 = sld [smem:[#allocation0]]
  $region74: #{vae_forward.1} parent=0
    _
  %s19 = ssub.s32 1, %s17
  %s20 = scalar_select 0, %s19, %s17
  $region1: #{vae_forward.1} parent=0
    #allocation2 [shape = 'u8[24576]{0}', space=vmem, size = 0x6000, scoped, tag = 'output window, operand 1, single buffered']
    #allocation3 [shape = 's32[1]{0}', space=sflag, size = 0x4, scoped, tag = 'scoped memory for vae_forward.1']
    %21 = vsyncpa [#allocation3], 0
    // Predicated region
    $region2: #{vae_forward.1} parent=1 // pred_check
      _
    $region3: #{vae_forward.1} parent=1 // pred_check_branch
      %23 = sbr.rel (0) target = $region5
    $region4: #{vae_forward.1} parent=1 // pred_region
      _
    $region5: #{vae_forward.1} parent=1 // pred_fallthru
      _
    // Predicated region
    $region6: #{vae_forward.1} parent=1 // pred_check
      _
    $region7: #{vae_forward.1} parent=1 // pred_check_branch
      %25 = sbr.rel (0) target = $region9
    $region8: #{vae_forward.1} parent=1 // pred_region
      _
    $region9: #{vae_forward.1} parent=1 // pred_fallthru
      _
    // Predicated region
    $region10: #{vae_forward.1} parent=1 // pred_check
      _
    $region11: #{vae_forward.1} parent=1 // pred_check_branch
      %27 = sbr.rel (0) target = $region13
    $region12: #{vae_forward.1} parent=1 // pred_region
      _
    $region13: #{vae_forward.1} parent=1 // pred_fallthru
      _
    // Predicated region
    $region14: #{vae_forward.1} parent=1 // pred_check
      _
    $region15: #{vae_forward.1} parent=1 // pred_check_branch
      %29 = sbr.rel (0) target = $region17
    $region16: #{vae_forward.1} parent=1 // pred_region
      _
    $region17: #{vae_forward.1} parent=1 // pred_fallthru
      _
    // Predicated region
    $region18: #{vae_forward.1} parent=1 // pred_check
      _
    $region19: #{vae_forward.1} parent=1 // pred_check_branch
      %31 = sbr.rel (0) target = $region21
    $region20: #{vae_forward.1} parent=1 // pred_region
      _
    $region21: #{vae_forward.1} parent=1 // pred_fallthru
      _
    // Predicated region
    $region22: #{vae_forward.1} parent=1 // pred_check
      _
    $region23: #{vae_forward.1} parent=1 // pred_check_branch
      %33 = sbr.rel (0) target = $region25
    $region24: #{vae_forward.1} parent=1 // pred_region
      _
    $region25: #{vae_forward.1} parent=1 // pred_fallthru
      _
    // Predicated region
    $region26: #{vae_forward.1} parent=1 // pred_check
      _
    $region27: #{vae_forward.1} parent=1 // pred_check_branch
      %35 = sbr.rel (0) target = $region29
    $region28: #{vae_forward.1} parent=1 // pred_region
      _
    $region29: #{vae_forward.1} parent=1 // pred_fallthru
      _
    // Predicated region
    $region30: #{vae_forward.1} parent=1 // pred_check
      _
    $region31: #{vae_forward.1} parent=1 // pred_check_branch
      %37 = sbr.rel (0) target = $region33
    $region32: #{vae_forward.1} parent=1 // pred_region
      _
    $region33: #{vae_forward.1} parent=1 // pred_fallthru
      _
    // Predicated region
    $region34: #{vae_forward.1} parent=1 // pred_check
      _
    $region35: #{vae_forward.1} parent=1 // pred_check_branch
      %39 = sbr.rel (0) target = $region37
    $region36: #{vae_forward.1} parent=1 // pred_region
      _
    $region37: #{vae_forward.1} parent=1 // pred_fallthru
      _
    // Predicated region
    $region38: #{vae_forward.1} parent=1 // pred_check
      _
    $region39: #{vae_forward.1} parent=1 // pred_check_branch
      %41 = sbr.rel (0) target = $region41
    $region40: #{vae_forward.1} parent=1 // pred_region
      _
    $region41: #{vae_forward.1} parent=1 // pred_fallthru
      _
    // Predicated region
    $region42: #{vae_forward.1} parent=1 // pred_check
      _
    $region43: #{vae_forward.1} parent=1 // pred_check_branch
      %43 = sbr.rel (0) target = $region45
    $region44: #{vae_forward.1} parent=1 // pred_region
      _
    $region45: #{vae_forward.1} parent=1 // pred_fallthru
      _
    // Predicated region
    $region46: #{vae_forward.1} parent=1 // pred_check
      _
    $region47: #{vae_forward.1} parent=1 // pred_check_branch
      %45 = sbr.rel (0) target = $region49
    $region48: #{vae_forward.1} parent=1 // pred_region
      _
    $region49: #{vae_forward.1} parent=1 // pred_fallthru
      _
    // Predicated region
    $region50: #{vae_forward.1} parent=1 // pred_check
      _
    $region51: #{vae_forward.1} parent=1 // pred_check_branch
      %47 = sbr.rel (0) target = $region53
    $region52: #{vae_forward.1} parent=1 // pred_region
      _
    $region53: #{vae_forward.1} parent=1 // pred_fallthru
      _
    // Predicated region
    $region54: #{vae_forward.1} parent=1 // pred_check
      _
    $region55: #{vae_forward.1} parent=1 // pred_check_branch
      %49 = sbr.rel (0) target = $region57
    $region56: #{vae_forward.1} parent=1 // pred_region
      _
    $region57: #{vae_forward.1} parent=1 // pred_fallthru
      _
    %v51 = vld [vmem:[%s0] sm:$0xff]
    %v52 = vld [vmem:[%s0 + $0x8] sm:$0xff]
    %v53 = vld [vmem:[%s0 + $0x10] sm:$0xff]
    %v54 = vld [vmem:[%s0 + $0x18] sm:$0xff]
    %v55 = vld [vmem:[%s0 + $0x20] sm:$0xff]
    %v56 = vld [vmem:[%s0 + $0x28] sm:$0xff]
    %v57 = vpack.c.bf16 %v51, %v51
    %v58 = vpack.c.bf16 %v52, %v52
    %v59 = vpack.c.bf16 %v53, %v53
    %v60 = vpack.c.bf16 %v54, %v54
    %v61 = vpack.c.bf16 %v55, %v55
    %v62 = vpack.c.bf16 %v56, %v56
    %v63 = vld [vmem:[%s2] sm:$0xf]
    %v64 = vld [vmem:[%s2 + $0x4] sm:$0xf]
    %v65 = vld [vmem:[%s2 + $0x8] sm:$0xf]
    %v66 = vld [vmem:[%s2 + $0xc] sm:$0xf]
    %v67 = vld [vmem:[%s2 + $0x10] sm:$0xf]
    %v68 = vld [vmem:[%s2 + $0x14] sm:$0xf]
    %v69 = vld [vmem:[%s2 + $0x18] sm:$0xf]
    %v70 = vld [vmem:[%s2 + $0x1c] sm:$0xf]
    %v71 = vld [vmem:[%s2 + $0x20] sm:$0xf]
    %v72 = vld [vmem:[%s2 + $0x24] sm:$0xf]
    %v73 = vld [vmem:[%s2 + $0x28] sm:$0xf]
    %v74 = vld [vmem:[%s2 + $0x2c] sm:$0xf]
    %v75 = vld [vmem:[%s2 + $0x30] sm:$0xf]
    %v76 = vld [vmem:[%s2 + $0x34] sm:$0xf]
    %v77 = vld [vmem:[%s2 + $0x38] sm:$0xf]
    %v78 = vld [vmem:[%s2 + $0x3c] sm:$0xf]
    %v79 = vld [vmem:[%s2 + $0x40] sm:$0xf]
    %v80 = vld [vmem:[%s2 + $0x44] sm:$0xf]
    %v81 = vld [vmem:[%s2 + $0x48] sm:$0xf]
    %v82 = vld [vmem:[%s2 + $0x4c] sm:$0xf]
    %v83 = vld [vmem:[%s2 + $0x50] sm:$0xf]
    %v84 = vld [vmem:[%s2 + $0x54] sm:$0xf]
    %v85 = vld [vmem:[%s2 + $0x58] sm:$0xf]
    %v86 = vld [vmem:[%s2 + $0x5c] sm:$0xf]
    %v87 = vld [vmem:[%s2 + $0x60] sm:$0xf]
    %v88 = vld [vmem:[%s2 + $0x64] sm:$0xf]
    %v89 = vld [vmem:[%s2 + $0x68] sm:$0xf]
    %v90 = vld [vmem:[%s2 + $0x6c] sm:$0xf]
    %v91 = vld [vmem:[%s2 + $0x70] sm:$0xf]
    %v92 = vld [vmem:[%s2 + $0x74] sm:$0xf]
    %v93 = vld [vmem:[%s2 + $0x78] sm:$0xf]
    %v94 = vld [vmem:[%s2 + $0x7c] sm:$0xf]
    %v95 = vld [vmem:[%s2 + $0x80] sm:$0xf]
    %v96 = vld [vmem:[%s2 + $0x84] sm:$0xf]
    %v97 = vld [vmem:[%s2 + $0x88] sm:$0xf]
    %v98 = vld [vmem:[%s2 + $0x8c] sm:$0xf]
    %v99 = vld [vmem:[%s2 + $0x90] sm:$0xf]
    %v100 = vld [vmem:[%s2 + $0x94] sm:$0xf]
    %v101 = vld [vmem:[%s2 + $0x98] sm:$0xf]
    %v102 = vld [vmem:[%s2 + $0x9c] sm:$0xf]
    %v103 = vld [vmem:[%s2 + $0xa0] sm:$0xf]
    %v104 = vld [vmem:[%s2 + $0xa4] sm:$0xf]
    %v105 = vld [vmem:[%s2 + $0xa8] sm:$0xf]
    %v106 = vld [vmem:[%s2 + $0xac] sm:$0xf]
    %v107 = vld [vmem:[%s2 + $0xb0] sm:$0xf]
    %v108 = vld [vmem:[%s2 + $0xb4] sm:$0xf]
    %v109 = vld [vmem:[%s2 + $0xb8] sm:$0xf]
    %v110 = vld [vmem:[%s2 + $0xbc] sm:$0xf]
    %v111 = vld [vmem:[%s2 + $0xc0] sm:$0xf]
    %v112 = vld [vmem:[%s2 + $0xc4] sm:$0xf]
    %v113 = vld [vmem:[%s2 + $0xc8] sm:$0xf]
    %v114 = vld [vmem:[%s2 + $0xcc] sm:$0xf]
    %v115 = vld [vmem:[%s2 + $0xd0] sm:$0xf]
    %v116 = vld [vmem:[%s2 + $0xd4] sm:$0xf]
    %v117 = vld [vmem:[%s2 + $0xd8] sm:$0xf]
    %v118 = vld [vmem:[%s2 + $0xdc] sm:$0xf]
    %v119 = vld [vmem:[%s2 + $0xe0] sm:$0xf]
    %v120 = vld [vmem:[%s2 + $0xe4] sm:$0xf]
    %v121 = vld [vmem:[%s2 + $0xe8] sm:$0xf]
    %v122 = vld [vmem:[%s2 + $0xec] sm:$0xf]
    %v123 = vld [vmem:[%s2 + $0xf0] sm:$0xf]
    %v124 = vld [vmem:[%s2 + $0xf4] sm:$0xf]
    %v125 = vld [vmem:[%s2 + $0xf8] sm:$0xf]
    %v126 = vld [vmem:[%s2 + $0xfc] sm:$0xf]
    %v127 = vld [vmem:[%s2 + $0x100] sm:$0xf]
    %v128 = vld [vmem:[%s2 + $0x104] sm:$0xf]
    %v129 = vld [vmem:[%s2 + $0x108] sm:$0xf]
    %v130 = vld [vmem:[%s2 + $0x10c] sm:$0xf]
    %v131 = vld [vmem:[%s2 + $0x110] sm:$0xf]
    %v132 = vld [vmem:[%s2 + $0x114] sm:$0xf]
    %v133 = vld [vmem:[%s2 + $0x118] sm:$0xf]
    %v134 = vld [vmem:[%s2 + $0x11c] sm:$0xf]
    %v135 = vld [vmem:[%s2 + $0x120] sm:$0xf]
    %v136 = vld [vmem:[%s2 + $0x124] sm:$0xf]
    %v137 = vld [vmem:[%s2 + $0x128] sm:$0xf]
    %v138 = vld [vmem:[%s2 + $0x12c] sm:$0xf]
    %v139 = vld [vmem:[%s2 + $0x130] sm:$0xf]
    %v140 = vld [vmem:[%s2 + $0x134] sm:$0xf]
    %v141 = vld [vmem:[%s2 + $0x138] sm:$0xf]
    %v142 = vld [vmem:[%s2 + $0x13c] sm:$0xf]
    %v143 = vld [vmem:[%s2 + $0x140] sm:$0xf]
    %v144 = vld [vmem:[%s2 + $0x144] sm:$0xf]
    %v145 = vld [vmem:[%s2 + $0x148] sm:$0xf]
    %v146 = vld [vmem:[%s2 + $0x14c] sm:$0xf]
    %v147 = vld [vmem:[%s2 + $0x150] sm:$0xf]
    %v148 = vld [vmem:[%s2 + $0x154] sm:$0xf]
    %v149 = vld [vmem:[%s2 + $0x158] sm:$0xf]
    %v150 = vld [vmem:[%s2 + $0x15c] sm:$0xf]
    %v151 = vld [vmem:[%s2 + $0x160] sm:$0xf]
    %v152 = vld [vmem:[%s2 + $0x164] sm:$0xf]
    %v153 = vld [vmem:[%s2 + $0x168] sm:$0xf]
    %v154 = vld [vmem:[%s2 + $0x16c] sm:$0xf]
    %v155 = vld [vmem:[%s2 + $0x170] sm:$0xf]
    %v156 = vld [vmem:[%s2 + $0x174] sm:$0xf]
    %v157 = vld [vmem:[%s2 + $0x178] sm:$0xf]
    %v158 = vld [vmem:[%s2 + $0x17c] sm:$0xf]
    %v159 = vld [vmem:[%s3] sm:$0x1]
    %v161 = vlaneseq
    %v162 = vshrl.u32 %v161, 7
    %v163 = vsub.s32 0, %v162
    %v164 = vrot.slane %v159, %v163
    %v262 = vunpack.c.l.b16 %v63
    %v263 = vunpack.c.l.b16 %v64
    %v264 = vunpack.c.l.b16 %v65
    %v265 = vunpack.c.l.b16 %v66
    %v266 = vunpack.c.l.b16 %v67
    %v267 = vunpack.c.l.b16 %v68
    %v268 = vunpack.c.l.b16 %v69
    %v269 = vunpack.c.l.b16 %v70
    %v270 = vunpack.c.l.b16 %v71
    %v271 = vunpack.c.l.b16 %v72
    %v272 = vunpack.c.l.b16 %v73
    %v273 = vunpack.c.l.b16 %v74
    %v274 = vunpack.c.l.b16 %v75
    %v275 = vunpack.c.l.b16 %v76
    %v276 = vunpack.c.l.b16 %v77
    %v277 = vunpack.c.l.b16 %v78
    %v278 = vunpack.c.l.b16 %v79
    %v279 = vunpack.c.l.b16 %v80
    %v280 = vunpack.c.l.b16 %v81
    %v281 = vunpack.c.l.b16 %v82
    %v282 = vunpack.c.l.b16 %v83
    %v283 = vunpack.c.l.b16 %v84
    %v284 = vunpack.c.l.b16 %v85
    %v285 = vunpack.c.l.b16 %v86
    %v286 = vunpack.c.l.b16 %v87
    %v287 = vunpack.c.l.b16 %v88
    %v288 = vunpack.c.l.b16 %v89
    %v289 = vunpack.c.l.b16 %v90
    %v290 = vunpack.c.l.b16 %v91
    %v291 = vunpack.c.l.b16 %v92
    %v292 = vunpack.c.l.b16 %v93
    %v293 = vunpack.c.l.b16 %v94
    %v294 = vunpack.c.l.b16 %v95
    %v295 = vunpack.c.l.b16 %v96
    %v296 = vunpack.c.l.b16 %v97
    %v297 = vunpack.c.l.b16 %v98
    %v298 = vunpack.c.l.b16 %v99
    %v299 = vunpack.c.l.b16 %v100
    %v300 = vunpack.c.l.b16 %v101
    %v301 = vunpack.c.l.b16 %v102
    %v302 = vunpack.c.l.b16 %v103
    %v303 = vunpack.c.l.b16 %v104
    %v304 = vunpack.c.l.b16 %v105
    %v305 = vunpack.c.l.b16 %v106
    %v306 = vunpack.c.l.b16 %v107
    %v307 = vunpack.c.l.b16 %v108
    %v308 = vunpack.c.l.b16 %v109
    %v309 = vunpack.c.l.b16 %v110
    %v310 = vunpack.c.l.b16 %v111
    %v311 = vunpack.c.l.b16 %v112
    %v312 = vunpack.c.l.b16 %v113
    %v313 = vunpack.c.l.b16 %v114
    %v314 = vunpack.c.l.b16 %v115
    %v315 = vunpack.c.l.b16 %v116
    %v316 = vunpack.c.l.b16 %v117
    %v317 = vunpack.c.l.b16 %v118
    %v318 = vunpack.c.l.b16 %v119
    %v319 = vunpack.c.l.b16 %v120
    %v320 = vunpack.c.l.b16 %v121
    %v321 = vunpack.c.l.b16 %v122
    %v322 = vunpack.c.l.b16 %v123
    %v323 = vunpack.c.l.b16 %v124
    %v324 = vunpack.c.l.b16 %v125
    %v325 = vunpack.c.l.b16 %v126
    %v326 = vunpack.c.l.b16 %v127
    %v327 = vunpack.c.l.b16 %v128
    %v328 = vunpack.c.l.b16 %v129
    %v329 = vunpack.c.l.b16 %v130
    %v330 = vunpack.c.l.b16 %v131
    %v331 = vunpack.c.l.b16 %v132
    %v332 = vunpack.c.l.b16 %v133
    %v333 = vunpack.c.l.b16 %v134
    %v334 = vunpack.c.l.b16 %v135
    %v335 = vunpack.c.l.b16 %v136
    %v336 = vunpack.c.l.b16 %v137
    %v337 = vunpack.c.l.b16 %v138
    %v338 = vunpack.c.l.b16 %v139
    %v339 = vunpack.c.l.b16 %v140
    %v340 = vunpack.c.l.b16 %v141
    %v341 = vunpack.c.l.b16 %v142
    %v342 = vunpack.c.l.b16 %v143
    %v343 = vunpack.c.l.b16 %v144
    %v344 = vunpack.c.l.b16 %v145
    %v345 = vunpack.c.l.b16 %v146
    %v346 = vunpack.c.l.b16 %v147
    %v347 = vunpack.c.l.b16 %v148
    %v348 = vunpack.c.l.b16 %v149
    %v349 = vunpack.c.l.b16 %v150
    %v350 = vunpack.c.l.b16 %v151
    %v351 = vunpack.c.l.b16 %v152
    %v352 = vunpack.c.l.b16 %v153
    %v353 = vunpack.c.l.b16 %v154
    %v354 = vunpack.c.l.b16 %v155
    %v355 = vunpack.c.l.b16 %v156
    %v356 = vunpack.c.l.b16 %v157
    %v357 = vunpack.c.l.b16 %v158
    %v358 = vpack.c.b16 %v263, %v262
    %v359 = vpack.c.b16 %v265, %v264
    %v360 = vpack.c.b16 %v267, %v266
    %v361 = vpack.c.b16 %v269, %v268
    %v362 = vpack.c.b16 %v271, %v270
    %v363 = vpack.c.b16 %v273, %v272
    %v364 = vpack.c.b16 %v275, %v274
    %v365 = vpack.c.b16 %v277, %v276
    %v366 = vpack.c.b16 %v279, %v278
    %v367 = vpack.c.b16 %v281, %v280
    %v368 = vpack.c.b16 %v283, %v282
    %v369 = vpack.c.b16 %v285, %v284
    %v370 = vpack.c.b16 %v287, %v286
    %v371 = vpack.c.b16 %v289, %v288
    %v372 = vpack.c.b16 %v291, %v290
    %v373 = vpack.c.b16 %v293, %v292
    %v374 = vpack.c.b16 %v295, %v294
    %v375 = vpack.c.b16 %v297, %v296
    %v376 = vpack.c.b16 %v299, %v298
    %v377 = vpack.c.b16 %v301, %v300
    %v378 = vpack.c.b16 %v303, %v302
    %v379 = vpack.c.b16 %v305, %v304
    %v380 = vpack.c.b16 %v307, %v306
    %v381 = vpack.c.b16 %v309, %v308
    %v382 = vpack.c.b16 %v311, %v310
    %v383 = vpack.c.b16 %v313, %v312
    %v384 = vpack.c.b16 %v315, %v314
    %v385 = vpack.c.b16 %v317, %v316
    %v386 = vpack.c.b16 %v319, %v318
    %v387 = vpack.c.b16 %v321, %v320
    %v388 = vpack.c.b16 %v323, %v322
    %v389 = vpack.c.b16 %v325, %v324
    %v390 = vpack.c.b16 %v327, %v326
    %v391 = vpack.c.b16 %v329, %v328
    %v392 = vpack.c.b16 %v331, %v330
    %v393 = vpack.c.b16 %v333, %v332
    %v394 = vpack.c.b16 %v335, %v334
    %v395 = vpack.c.b16 %v337, %v336
    %v396 = vpack.c.b16 %v339, %v338
    %v397 = vpack.c.b16 %v341, %v340
    %v398 = vpack.c.b16 %v343, %v342
    %v399 = vpack.c.b16 %v345, %v344
    %v400 = vpack.c.b16 %v347, %v346
    %v401 = vpack.c.b16 %v349, %v348
    %v402 = vpack.c.b16 %v351, %v350
    %v403 = vpack.c.b16 %v353, %v352
    %v404 = vpack.c.b16 %v355, %v354
    %v405 = vpack.c.b16 %v357, %v356
    %454 = vmatprep.subr.bf16.mxu0 0
    %455 = vmatpush1.bf16.msra.mxu0 %v365
    %456 = vmatprep.subr.bf16.mxu0 0
    %457 = vmatpush1.bf16.msra.mxu0 %v364
    %458 = vmatprep.subr.bf16.mxu0 0
    %459 = vmatpush1.bf16.msra.mxu0 %v363
    %460 = vmatprep.subr.bf16.mxu0 0
    %461 = vmatpush1.bf16.msra.mxu0 %v362
    %462 = vmatprep.subr.bf16.mxu0 0
    %463 = vmatpush1.bf16.msra.mxu0 %v361
    %464 = vmatprep.subr.bf16.mxu0 0
    %465 = vmatpush1.bf16.msra.mxu0 %v360
    %466 = vmatprep.subr.bf16.mxu0 0
    %467 = vmatpush1.bf16.msra.mxu0 %v359
    %468 = vmatprep.subr.bf16.mxu0 0
    %469 = vmatpush1.bf16.msra.mxu0 %v358
    %470 = vmatprep.subr.bf16.mxu0 0
    %471 = vmatpush2.bf16.msra.mxu0 %v373
    %472 = vmatprep.subr.bf16.mxu0 0
    %473 = vmatpush2.bf16.msra.mxu0 %v372
    %474 = vmatprep.subr.bf16.mxu0 0
    %475 = vmatpush2.bf16.msra.mxu0 %v371
    %476 = vmatprep.subr.bf16.mxu0 0
    %477 = vmatpush2.bf16.msra.mxu0 %v370
    %478 = vmatprep.subr.bf16.mxu0 0
    %479 = vmatpush2.bf16.msra.mxu0 %v369
    %480 = vmatprep.subr.bf16.mxu0 0
    %481 = vmatpush2.bf16.msra.mxu0 %v368
    %482 = vmatprep.subr.bf16.mxu0 0
    %483 = vmatpush2.bf16.msra.mxu0 %v367
    %484 = vmatprep.subr.bf16.mxu0 0
    %485 = vmatpush2.bf16.msra.mxu0 %v366
    %486 = vmatprep.mubr.bf16.mxu0 %v58
    %487 = vmatmul.mubr.bf16.gmra.mxu0 %v57
    %v488 = vpop.f32.mrf.mxu0
    %v489 = vadd.f32 %v164, %v488
    %v490 = vpop.f32.mrf.mxu0
    %v491 = vpop.f32.mrf.mxu0
    %v492 = vpop.f32.mrf.mxu0
    %493 = vdwg.mxu0
    %494 = vmatprep.subr.bf16.mxu0 0
    %495 = vmatpush1.bf16.msra.mxu0 %v381
    %496 = vmatprep.subr.bf16.mxu0 0
    %497 = vmatpush1.bf16.msra.mxu0 %v380
    %498 = vmatprep.subr.bf16.mxu0 0
    %499 = vmatpush1.bf16.msra.mxu0 %v379
    %500 = vmatprep.subr.bf16.mxu0 0
    %501 = vmatpush1.bf16.msra.mxu0 %v378
    %502 = vmatprep.subr.bf16.mxu0 0
    %503 = vmatpush1.bf16.msra.mxu0 %v377
    %504 = vmatprep.subr.bf16.mxu0 0
    %505 = vmatpush1.bf16.msra.mxu0 %v376
    %506 = vmatprep.subr.bf16.mxu0 0
    %507 = vmatpush1.bf16.msra.mxu0 %v375
    %508 = vmatprep.subr.bf16.mxu0 0
    %509 = vmatpush1.bf16.msra.mxu0 %v374
    %510 = vmatprep.subr.bf16.mxu0 0
    %511 = vmatpush2.bf16.msra.mxu0 %v389
    %512 = vmatprep.subr.bf16.mxu0 0
    %513 = vmatpush2.bf16.msra.mxu0 %v388
    %514 = vmatprep.subr.bf16.mxu0 0
    %515 = vmatpush2.bf16.msra.mxu0 %v387
    %516 = vmatprep.subr.bf16.mxu0 0
    %517 = vmatpush2.bf16.msra.mxu0 %v386
    %518 = vmatprep.subr.bf16.mxu0 0
    %519 = vmatpush2.bf16.msra.mxu0 %v385
    %520 = vmatprep.subr.bf16.mxu0 0
    %521 = vmatpush2.bf16.msra.mxu0 %v384
    %522 = vmatprep.subr.bf16.mxu0 0
    %523 = vmatpush2.bf16.msra.mxu0 %v383
    %524 = vmatprep.subr.bf16.mxu0 0
    %525 = vmatpush2.bf16.msra.mxu0 %v382
    %526 = vmatprep.mubr.bf16.mxu0 %v60
    %527 = vmatmul.mubr.bf16.gmra.mxu0 %v59
    %v528 = vpop.f32.mrf.mxu0
    %v529 = vadd.f32 %v489, %v528
    %v530 = vpop.f32.mrf.mxu0
    %v531 = vpop.f32.mrf.mxu0
    %v532 = vpop.f32.mrf.mxu0
    %533 = vdwg.mxu0
    %534 = vmatprep.subr.bf16.mxu0 0
    %535 = vmatpush1.bf16.msra.mxu0 %v397
    %536 = vmatprep.subr.bf16.mxu0 0
    %537 = vmatpush1.bf16.msra.mxu0 %v396
    %538 = vmatprep.subr.bf16.mxu0 0
    %539 = vmatpush1.bf16.msra.mxu0 %v395
    %540 = vmatprep.subr.bf16.mxu0 0
    %541 = vmatpush1.bf16.msra.mxu0 %v394
    %542 = vmatprep.subr.bf16.mxu0 0
    %543 = vmatpush1.bf16.msra.mxu0 %v393
    %544 = vmatprep.subr.bf16.mxu0 0
    %545 = vmatpush1.bf16.msra.mxu0 %v392
    %546 = vmatprep.subr.bf16.mxu0 0
    %547 = vmatpush1.bf16.msra.mxu0 %v391
    %548 = vmatprep.subr.bf16.mxu0 0
    %549 = vmatpush1.bf16.msra.mxu0 %v390
    %550 = vmatprep.subr.bf16.mxu0 0
    %551 = vmatpush2.bf16.msra.mxu0 %v405
    %552 = vmatprep.subr.bf16.mxu0 0
    %553 = vmatpush2.bf16.msra.mxu0 %v404
    %554 = vmatprep.subr.bf16.mxu0 0
    %555 = vmatpush2.bf16.msra.mxu0 %v403
    %556 = vmatprep.subr.bf16.mxu0 0
    %557 = vmatpush2.bf16.msra.mxu0 %v402
    %558 = vmatprep.subr.bf16.mxu0 0
    %559 = vmatpush2.bf16.msra.mxu0 %v401
    %560 = vmatprep.subr.bf16.mxu0 0
    %561 = vmatpush2.bf16.msra.mxu0 %v400
    %562 = vmatprep.subr.bf16.mxu0 0
    %563 = vmatpush2.bf16.msra.mxu0 %v399
    %564 = vmatprep.subr.bf16.mxu0 0
    %565 = vmatpush2.bf16.msra.mxu0 %v398
    %566 = vmatprep.mubr.bf16.mxu0 %v62
    %567 = vmatmul.mubr.bf16.gmra.mxu0 %v61
    %v568 = vpop.f32.mrf.mxu0
    %v569 = vadd.f32 %v529, %v568
    %v570 = vpop.f32.mrf.mxu0
    %v571 = vpop.f32.mrf.mxu0
    %v572 = vpop.f32.mrf.mxu0
    %573 = vdwg.mxu0
    %v574 = vmax.f32 %v569, 0.0
    %v575 = vpack.c.bf16 %v574, %v574
    %v576 = vld [vmem:[%s4] sm:$0xf]
    %v577 = vld [vmem:[%s4 + $0x4] sm:$0xf]
    %v578 = vld [vmem:[%s4 + $0x8] sm:$0xf]
    %v579 = vld [vmem:[%s4 + $0xc] sm:$0xf]
    %v580 = vld [vmem:[%s4 + $0x10] sm:$0xf]
    %v581 = vld [vmem:[%s4 + $0x14] sm:$0xf]
    %v582 = vld [vmem:[%s4 + $0x18] sm:$0xf]
    %v583 = vld [vmem:[%s4 + $0x1c] sm:$0xf]
    %v584 = vld [vmem:[%s5] sm:$0x1]
    %v586 = vlaneseq
    %v587 = vshrl.u32 %v586, 7
    %v588 = vsub.s32 0, %v587
    %v589 = vrot.slane %v584, %v588
    %v599 = vunpack.c.l.b16 %v576
    %v600 = vunpack.c.l.b16 %v577
    %v601 = vunpack.c.l.b16 %v578
    %v602 = vunpack.c.l.b16 %v579
    %v603 = vunpack.c.l.b16 %v580
    %v604 = vunpack.c.l.b16 %v581
    %v605 = vunpack.c.l.b16 %v582
    %v606 = vunpack.c.l.b16 %v583
    %v607 = vpack.c.b16 %v600, %v599
    %v608 = vpack.c.b16 %v602, %v601
    %v609 = vpack.c.b16 %v604, %v603
    %v610 = vpack.c.b16 %v606, %v605
    %vm615 = vcmask 523264
    %v617 = vsel %vm615, %v575, 0
    %619 = vmatprep.subr.bf16.mxu0 0
    %620 = vmatpush1.bf16.msra.mxu0 0
    %621 = vmatprep.subr.bf16.mxu0 0
    %622 = vmatpush1.bf16.msra.mxu0 0
    %623 = vmatprep.subr.bf16.mxu0 0
    %624 = vmatpush1.bf16.msra.mxu0 0
    %625 = vmatprep.subr.bf16.mxu0 0
    %626 = vmatpush1.bf16.msra.mxu0 0
    %627 = vmatprep.subr.bf16.mxu0 0
    %628 = vmatpush1.bf16.msra.mxu0 %v610
    %629 = vmatprep.subr.bf16.mxu0 0
    %630 = vmatpush1.bf16.msra.mxu0 %v609
    %631 = vmatprep.subr.bf16.mxu0 0
    %632 = vmatpush1.bf16.msra.mxu0 %v608
    %633 = vmatprep.subr.bf16.mxu0 0
    %634 = vmatpush1.bf16.msra.mxu0 %v607
    %635 = vmatprep.subr.bf16.mxu0 0
    %636 = vmatpush2.bf16.msra.mxu0 0
    %637 = vmatprep.subr.bf16.mxu0 0
    %638 = vmatpush2.bf16.msra.mxu0 0
    %639 = vmatprep.subr.bf16.mxu0 0
    %640 = vmatpush2.bf16.msra.mxu0 0
    %641 = vmatprep.subr.bf16.mxu0 0
    %642 = vmatpush2.bf16.msra.mxu0 0
    %643 = vmatprep.subr.bf16.mxu0 0
    %644 = vmatpush2.bf16.msra.mxu0 0
    %645 = vmatprep.subr.bf16.mxu0 0
    %646 = vmatpush2.bf16.msra.mxu0 0
    %647 = vmatprep.subr.bf16.mxu0 0
    %648 = vmatpush2.bf16.msra.mxu0 0
    %649 = vmatprep.subr.bf16.mxu0 0
    %650 = vmatpush2.bf16.msra.mxu0 0
    %651 = vmatprep.mubr.bf16.mxu0 0
    %652 = vmatmul.mubr.bf16.gmra.mxu0 %v617
    %v653 = vpop.f32.mrf.mxu0
    %v654 = vadd.f32 %v589, %v653
    %v655 = vpop.f32.mrf.mxu0
    %v656 = vpop.f32.mrf.mxu0
    %v657 = vpop.f32.mrf.mxu0
    %658 = vdwg.mxu0
    %v659 = vmax.f32 %v654, 0.0
    %v660 = vpack.c.bf16 %v659, %v659
    %v661 = vld [vmem:[%s6] sm:$0xf]
    %v662 = vld [vmem:[%s6 + $0x4] sm:$0xf]
    %v663 = vld [vmem:[%s6 + $0x8] sm:$0xf]
    %v664 = vld [vmem:[%s6 + $0xc] sm:$0xf]
    %v665 = vld [vmem:[%s7] sm:$0x1]
    %v667 = vlaneseq
    %v668 = vshrl.u32 %v667, 7
    %v669 = vsub.s32 0, %v668
    %v670 = vrot.slane %v665, %v669
    %v676 = vunpack.c.l.b16 %v661
    %v677 = vunpack.c.l.b16 %v662
    %v678 = vunpack.c.l.b16 %v663
    %v679 = vunpack.c.l.b16 %v664
    %v680 = vpack.c.b16 %v677, %v676
    %v681 = vpack.c.b16 %v679, %v678
    %vm684 = vcmask 261120
    %v686 = vsel %vm684, %v660, 0
    %688 = vmatprep.subr.bf16.mxu0 0
    %689 = vmatpush1.bf16.msra.mxu0 0
    %690 = vmatprep.subr.bf16.mxu0 0
    %691 = vmatpush1.bf16.msra.mxu0 0
    %692 = vmatprep.subr.bf16.mxu0 0
    %693 = vmatpush1.bf16.msra.mxu0 0
    %694 = vmatprep.subr.bf16.mxu0 0
    %695 = vmatpush1.bf16.msra.mxu0 0
    %696 = vmatprep.subr.bf16.mxu0 0
    %697 = vmatpush1.bf16.msra.mxu0 0
    %698 = vmatprep.subr.bf16.mxu0 0
    %699 = vmatpush1.bf16.msra.mxu0 0
    %700 = vmatprep.subr.bf16.mxu0 0
    %701 = vmatpush1.bf16.msra.mxu0 %v681
    %702 = vmatprep.subr.bf16.mxu0 0
    %703 = vmatpush1.bf16.msra.mxu0 %v680
    %704 = vmatprep.subr.bf16.mxu0 0
    %705 = vmatpush2.bf16.msra.mxu0 0
    %706 = vmatprep.subr.bf16.mxu0 0
    %707 = vmatpush2.bf16.msra.mxu0 0
    %708 = vmatprep.subr.bf16.mxu0 0
    %709 = vmatpush2.bf16.msra.mxu0 0
    %710 = vmatprep.subr.bf16.mxu0 0
    %711 = vmatpush2.bf16.msra.mxu0 0
    %712 = vmatprep.subr.bf16.mxu0 0
    %713 = vmatpush2.bf16.msra.mxu0 0
    %714 = vmatprep.subr.bf16.mxu0 0
    %715 = vmatpush2.bf16.msra.mxu0 0
    %716 = vmatprep.subr.bf16.mxu0 0
    %717 = vmatpush2.bf16.msra.mxu0 0
    %718 = vmatprep.subr.bf16.mxu0 0
    %719 = vmatpush2.bf16.msra.mxu0 0
    %720 = vmatprep.mubr.bf16.mxu0 0
    %721 = vmatmul.mubr.bf16.gmra.mxu0 %v686
    %v722 = vpop.f32.mrf.mxu0
    %v723 = vadd.f32 %v670, %v722
    %v724 = vpop.f32.mrf.mxu0
    %v725 = vpop.f32.mrf.mxu0
    %v726 = vpop.f32.mrf.mxu0
    %727 = vdwg.mxu0
    %v728 = vmax.f32 %v723, 0.0
    %v729 = vand.u32 2147483647, %v723
    %v730 = vsub.f32 0.0, %v729
    %v731 = vmul.f32 %v730, 1.442695
    %v732 = vpow.pop %v731
    %v733 = vadd.f32 %v732, 1.0
    %v734 = vlog2.pop %v733
    %v735 = vmul.f32 %v734, 0.6931472
    %v736 = vmul.f32 -0.5, %v732
    %v737 = vadd.f32 %v736, 1.0
    %v738 = vmul.f32 %v737, %v732
    %v739 = vand.u32 2147483647, %v732
    %vm740 = vcmp.lt.f32.partialorder %v739, 0.0004427343
    %v741 = vsel %vm740, %v738, %v735
    %v742 = vadd.f32 %v728, %v741
    %v743 = vld [vmem:[%s1] sm:$0xff]
    %745 = vrot.lane.b32.xlu0 %v743, 8
    %v746 = vpop.permute.xlu0 %745
    %v748 = vmul.f32 %v742, %v746
    %750 = vrot.lane.b32.xlu0 %v748, 120
    %v751 = vpop.permute.xlu0 %750
    %v753 = vadd.f32 %v723, %v751
    %v754 = vpack.c.bf16 %v753, %v753
    %v755 = vld [vmem:[%s8] sm:$0xf]
    %v756 = vld [vmem:[%s9] sm:$0x1]
    %v758 = vlaneseq
    %v759 = vshrl.u32 %v758, 7
    %v760 = vsub.s32 0, %v759
    %v761 = vrot.slane %v756, %v760
    %vm763 = vcmask 64512
    %v765 = vsel %vm763, %v754, 0
    %vm767 = vcmask 1043456
    %v769 = vsel %vm767, %v755, 0
    %771 = vmatprep.subr.bf16.mxu0 0
    %772 = vmatpush1.bf16.msra.mxu0 0
    %773 = vmatprep.subr.bf16.mxu0 0
    %774 = vmatpush1.bf16.msra.mxu0 0
    %775 = vmatprep.subr.bf16.mxu0 0
    %776 = vmatpush1.bf16.msra.mxu0 0
    %777 = vmatprep.subr.bf16.mxu0 0
    %778 = vmatpush1.bf16.msra.mxu0 0
    %779 = vmatprep.subr.bf16.mxu0 0
    %780 = vmatpush1.bf16.msra.mxu0 0
    %781 = vmatprep.subr.bf16.mxu0 0
    %782 = vmatpush1.bf16.msra.mxu0 0
    %783 = vmatprep.subr.bf16.mxu0 0
    %784 = vmatpush1.bf16.msra.mxu0 0
    %785 = vmatprep.subr.bf16.mxu0 0
    %786 = vmatpush1.bf16.msra.mxu0 %v769
    %787 = vmatprep.subr.bf16.mxu0 0
    %788 = vmatpush2.bf16.msra.mxu0 0
    %789 = vmatprep.subr.bf16.mxu0 0
    %790 = vmatpush2.bf16.msra.mxu0 0
    %791 = vmatprep.subr.bf16.mxu0 0
    %792 = vmatpush2.bf16.msra.mxu0 0
    %793 = vmatprep.subr.bf16.mxu0 0
    %794 = vmatpush2.bf16.msra.mxu0 0
    %795 = vmatprep.subr.bf16.mxu0 0
    %796 = vmatpush2.bf16.msra.mxu0 0
    %797 = vmatprep.subr.bf16.mxu0 0
    %798 = vmatpush2.bf16.msra.mxu0 0
    %799 = vmatprep.subr.bf16.mxu0 0
    %800 = vmatpush2.bf16.msra.mxu0 0
    %801 = vmatprep.subr.bf16.mxu0 0
    %802 = vmatpush2.bf16.msra.mxu0 0
    %803 = vmatprep.mubr.bf16.mxu0 0
    %804 = vmatmul.mubr.bf16.gmra.mxu0 %v765
    %v805 = vpop.f32.mrf.mxu0
    %v806 = vadd.f32 %v761, %v805
    %v807 = vpop.f32.mrf.mxu0
    %v808 = vpop.f32.mrf.mxu0
    %v809 = vpop.f32.mrf.mxu0
    %810 = vdwg.mxu0
    %v811 = vmax.f32 %v806, 0.0
    %v812 = vpack.c.bf16 %v811, %v811
    %v813 = vld [vmem:[%s10] sm:$0xf]
    %v814 = vld [vmem:[%s10 + $0x4] sm:$0xf]
    %v815 = vld [vmem:[%s10 + $0x8] sm:$0xf]
    %v816 = vld [vmem:[%s10 + $0xc] sm:$0xf]
    %v817 = vld [vmem:[%s11] sm:$0x1]
    %v819 = vlaneseq
    %v820 = vshrl.u32 %v819, 7
    %v821 = vsub.s32 0, %v820
    %v822 = vrot.slane %v817, %v821
    %v828 = vunpack.c.l.b16 %v813
    %v829 = vunpack.c.l.b16 %v814
    %v830 = vunpack.c.l.b16 %v815
    %v831 = vunpack.c.l.b16 %v816
    %v832 = vpack.c.b16 %v829, %v828
    %v833 = vpack.c.b16 %v831, %v830
    %v837 = vsel %vm684, %v812, 0
    %839 = vmatprep.subr.bf16.mxu0 0
    %840 = vmatpush1.bf16.msra.mxu0 0
    %841 = vmatprep.subr.bf16.mxu0 0
    %842 = vmatpush1.bf16.msra.mxu0 0
    %843 = vmatprep.subr.bf16.mxu0 0
    %844 = vmatpush1.bf16.msra.mxu0 0
    %845 = vmatprep.subr.bf16.mxu0 0
    %846 = vmatpush1.bf16.msra.mxu0 0
    %847 = vmatprep.subr.bf16.mxu0 0
    %848 = vmatpush1.bf16.msra.mxu0 0
    %849 = vmatprep.subr.bf16.mxu0 0
    %850 = vmatpush1.bf16.msra.mxu0 0
    %851 = vmatprep.subr.bf16.mxu0 0
    %852 = vmatpush1.bf16.msra.mxu0 %v833
    %853 = vmatprep.subr.bf16.mxu0 0
    %854 = vmatpush1.bf16.msra.mxu0 %v832
    %855 = vmatprep.subr.bf16.mxu0 0
    %856 = vmatpush2.bf16.msra.mxu0 0
    %857 = vmatprep.subr.bf16.mxu0 0
    %858 = vmatpush2.bf16.msra.mxu0 0
    %859 = vmatprep.subr.bf16.mxu0 0
    %860 = vmatpush2.bf16.msra.mxu0 0
    %861 = vmatprep.subr.bf16.mxu0 0
    %862 = vmatpush2.bf16.msra.mxu0 0
    %863 = vmatprep.subr.bf16.mxu0 0
    %864 = vmatpush2.bf16.msra.mxu0 0
    %865 = vmatprep.subr.bf16.mxu0 0
    %866 = vmatpush2.bf16.msra.mxu0 0
    %867 = vmatprep.subr.bf16.mxu0 0
    %868 = vmatpush2.bf16.msra.mxu0 0
    %869 = vmatprep.subr.bf16.mxu0 0
    %870 = vmatpush2.bf16.msra.mxu0 0
    %871 = vmatprep.mubr.bf16.mxu0 0
    %872 = vmatmul.mubr.bf16.gmra.mxu0 %v837
    %v873 = vpop.f32.mrf.mxu0
    %v874 = vadd.f32 %v822, %v873
    %v875 = vpop.f32.mrf.mxu0
    %v876 = vpop.f32.mrf.mxu0
    %v877 = vpop.f32.mrf.mxu0
    %878 = vdwg.mxu0
    %v879 = vmax.f32 %v874, 0.0
    %v880 = vpack.c.bf16 %v879, %v879
    %v881 = vld [vmem:[%s12] sm:$0xff]
    %v882 = vld [vmem:[%s12 + $0x8] sm:$0xff]
    %v883 = vld [vmem:[%s12 + $0x10] sm:$0xff]
    %v884 = vld [vmem:[%s12 + $0x18] sm:$0xff]
    %v885 = vld [vmem:[%s12 + $0x20] sm:$0xff]
    %v886 = vld [vmem:[%s12 + $0x28] sm:$0xff]
    %v887 = vld [vmem:[%s12 + $0x30] sm:$0xff]
    %v888 = vld [vmem:[%s12 + $0x38] sm:$0xff]
    %v889 = vld [vmem:[%s12 + $0x40] sm:$0xff]
    %v890 = vld [vmem:[%s12 + $0x48] sm:$0xff]
    %v891 = vld [vmem:[%s12 + $0x50] sm:$0xff]
    %v892 = vld [vmem:[%s12 + $0x58] sm:$0xff]
    %v893 = vld [vmem:[%s12 + $0x60] sm:$0xff]
    %v894 = vld [vmem:[%s12 + $0x68] sm:$0xff]
    %v895 = vld [vmem:[%s12 + $0x70] sm:$0xff]
    %v896 = vld [vmem:[%s12 + $0x78] sm:$0xff]
    %v897 = vld [vmem:[%s12 + $0x80] sm:$0xff]
    %v898 = vld [vmem:[%s12 + $0x88] sm:$0xff]
    %v899 = vld [vmem:[%s12 + $0x90] sm:$0xff]
    %v900 = vld [vmem:[%s12 + $0x98] sm:$0xff]
    %v901 = vld [vmem:[%s12 + $0xa0] sm:$0xff]
    %v902 = vld [vmem:[%s12 + $0xa8] sm:$0xff]
    %v903 = vld [vmem:[%s12 + $0xb0] sm:$0xff]
    %v904 = vld [vmem:[%s12 + $0xb8] sm:$0xff]
    %v905 = vld [vmem:[%s13] sm:$0x3f]
    %v907 = vlaneseq
    %v908 = vshrl.u32 %v907, 7
    %v909 = vsub.s32 0, %v908
    %v910 = vrot.slane %v905, %v909
    %v911 = vlaneseq
    %v912 = vshrl.u32 %v911, 7
    %v913 = vsub.s32 1, %v912
    %v914 = vrot.slane %v905, %v913
    %v915 = vlaneseq
    %v916 = vshrl.u32 %v915, 7
    %v917 = vsub.s32 2, %v916
    %v918 = vrot.slane %v905, %v917
    %v919 = vlaneseq
    %v920 = vshrl.u32 %v919, 7
    %v921 = vsub.s32 3, %v920
    %v922 = vrot.slane %v905, %v921
    %v923 = vlaneseq
    %v924 = vshrl.u32 %v923, 7
    %v925 = vsub.s32 4, %v924
    %v926 = vrot.slane %v905, %v925
    %v927 = vlaneseq
    %v928 = vshrl.u32 %v927, 7
    %v929 = vsub.s32 5, %v928
    %v930 = vrot.slane %v905, %v929
    %v961 = vunpack.c.l.b16 %v881
    %v962 = vunpack.c.h.b16 %v881
    %v963 = vunpack.c.l.b16 %v882
    %v964 = vunpack.c.h.b16 %v882
    %v965 = vunpack.c.l.b16 %v883
    %v966 = vunpack.c.h.b16 %v883
    %v967 = vunpack.c.l.b16 %v884
    %v968 = vunpack.c.h.b16 %v884
    %v969 = vunpack.c.l.b16 %v885
    %v970 = vunpack.c.h.b16 %v885
    %v971 = vunpack.c.l.b16 %v886
    %v972 = vunpack.c.h.b16 %v886
    %v973 = vunpack.c.l.b16 %v887
    %v974 = vunpack.c.h.b16 %v887
    %v975 = vunpack.c.l.b16 %v888
    %v976 = vunpack.c.h.b16 %v888
    %v977 = vunpack.c.l.b16 %v889
    %v978 = vunpack.c.h.b16 %v889
    %v979 = vunpack.c.l.b16 %v890
    %v980 = vunpack.c.h.b16 %v890
    %v981 = vunpack.c.l.b16 %v891
    %v982 = vunpack.c.h.b16 %v891
    %v983 = vunpack.c.l.b16 %v892
    %v984 = vunpack.c.h.b16 %v892
    %v985 = vunpack.c.l.b16 %v893
    %v986 = vunpack.c.h.b16 %v893
    %v987 = vunpack.c.l.b16 %v894
    %v988 = vunpack.c.h.b16 %v894
    %v989 = vunpack.c.l.b16 %v895
    %v990 = vunpack.c.h.b16 %v895
    %v991 = vunpack.c.l.b16 %v896
    %v992 = vunpack.c.h.b16 %v896
    %v993 = vunpack.c.l.b16 %v897
    %v994 = vunpack.c.h.b16 %v897
    %v995 = vunpack.c.l.b16 %v898
    %v996 = vunpack.c.h.b16 %v898
    %v997 = vunpack.c.l.b16 %v899
    %v998 = vunpack.c.h.b16 %v899
    %v999 = vunpack.c.l.b16 %v900
    %v1000 = vunpack.c.h.b16 %v900
    %v1001 = vunpack.c.l.b16 %v901
    %v1002 = vunpack.c.h.b16 %v901
    %v1003 = vunpack.c.l.b16 %v902
    %v1004 = vunpack.c.h.b16 %v902
    %v1005 = vunpack.c.l.b16 %v903
    %v1006 = vunpack.c.h.b16 %v903
    %v1007 = vunpack.c.l.b16 %v904
    %v1008 = vunpack.c.h.b16 %v904
    %v1009 = vpack.c.b16 %v967, %v961
    %v1010 = vpack.c.b16 %v968, %v962
    %v1011 = vpack.c.b16 %v969, %v963
    %v1012 = vpack.c.b16 %v970, %v964
    %v1013 = vpack.c.b16 %v971, %v965
    %v1014 = vpack.c.b16 %v972, %v966
    %v1015 = vpack.c.b16 %v979, %v973
    %v1016 = vpack.c.b16 %v980, %v974
    %v1017 = vpack.c.b16 %v981, %v975
    %v1018 = vpack.c.b16 %v982, %v976
    %v1019 = vpack.c.b16 %v983, %v977
    %v1020 = vpack.c.b16 %v984, %v978
    %v1021 = vpack.c.b16 %v991, %v985
    %v1022 = vpack.c.b16 %v992, %v986
    %v1023 = vpack.c.b16 %v993, %v987
    %v1024 = vpack.c.b16 %v994, %v988
    %v1025 = vpack.c.b16 %v995, %v989
    %v1026 = vpack.c.b16 %v996, %v990
    %v1027 = vpack.c.b16 %v1003, %v997
    %v1028 = vpack.c.b16 %v1004, %v998
    %v1029 = vpack.c.b16 %v1005, %v999
    %v1030 = vpack.c.b16 %v1006, %v1000
    %v1031 = vpack.c.b16 %v1007, %v1001
    %v1032 = vpack.c.b16 %v1008, %v1002
    %v1058 = vsel %vm615, %v880, 0
    %1060 = vmatprep.subr.bf16.mxu0 0
    %1061 = vmatpush1.bf16.msra.mxu0 0
    %1062 = vmatprep.subr.bf16.mxu0 0
    %1063 = vmatpush1.bf16.msra.mxu0 0
    %1064 = vmatprep.subr.bf16.mxu0 0
    %1065 = vmatpush1.bf16.msra.mxu0 0
    %1066 = vmatprep.subr.bf16.mxu0 0
    %1067 = vmatpush1.bf16.msra.mxu0 0
    %1068 = vmatprep.subr.bf16.mxu0 %v1028
    %1069 = vmatpush1.bf16.msra.mxu0 %v1027
    %1070 = vmatprep.subr.bf16.mxu0 %v1022
    %1071 = vmatpush1.bf16.msra.mxu0 %v1021
    %1072 = vmatprep.subr.bf16.mxu0 %v1016
    %1073 = vmatpush1.bf16.msra.mxu0 %v1015
    %1074 = vmatprep.subr.bf16.mxu0 %v1010
    %1075 = vmatpush1.bf16.msra.mxu0 %v1009
    %1076 = vmatprep.subr.bf16.mxu0 0
    %1077 = vmatpush2.bf16.msra.mxu0 0
    %1078 = vmatprep.subr.bf16.mxu0 0
    %1079 = vmatpush2.bf16.msra.mxu0 0
    %1080 = vmatprep.subr.bf16.mxu0 0
    %1081 = vmatpush2.bf16.msra.mxu0 0
    %1082 = vmatprep.subr.bf16.mxu0 0
    %1083 = vmatpush2.bf16.msra.mxu0 0
    %1084 = vmatprep.subr.bf16.mxu0 0
    %1085 = vmatpush2.bf16.msra.mxu0 0
    %1086 = vmatprep.subr.bf16.mxu0 0
    %1087 = vmatpush2.bf16.msra.mxu0 0
    %1088 = vmatprep.subr.bf16.mxu0 0
    %1089 = vmatpush2.bf16.msra.mxu0 0
    %1090 = vmatprep.subr.bf16.mxu0 0
    %1091 = vmatpush2.bf16.msra.mxu0 0
    %1092 = vmatprep.mubr.bf16.mxu0 0
    %1093 = vmatmul.mubr.bf16.gmra.mxu0 %v1058
    %v1094 = vpop.f32.mrf.mxu0
    %v1095 = vadd.f32 %v910, %v1094
    %v1096 = vpop.f32.mrf.mxu0
    %v1097 = vadd.f32 %v914, %v1096
    %v1098 = vpop.f32.mrf.mxu0
    %v1099 = vpop.f32.mrf.mxu0
    %1100 = vdwg.mxu0
    %1101 = vmatprep.subr.bf16.mxu0 0
    %1102 = vmatpush1.bf16.msra.mxu0 0
    %1103 = vmatprep.subr.bf16.mxu0 0
    %1104 = vmatpush1.bf16.msra.mxu0 0
    %1105 = vmatprep.subr.bf16.mxu0 0
    %1106 = vmatpush1.bf16.msra.mxu0 0
    %1107 = vmatprep.subr.bf16.mxu0 0
    %1108 = vmatpush1.bf16.msra.mxu0 0
    %1109 = vmatprep.subr.bf16.mxu0 %v1030
    %1110 = vmatpush1.bf16.msra.mxu0 %v1029
    %1111 = vmatprep.subr.bf16.mxu0 %v1024
    %1112 = vmatpush1.bf16.msra.mxu0 %v1023
    %1113 = vmatprep.subr.bf16.mxu0 %v1018
    %1114 = vmatpush1.bf16.msra.mxu0 %v1017
    %1115 = vmatprep.subr.bf16.mxu0 %v1012
    %1116 = vmatpush1.bf16.msra.mxu0 %v1011
    %1117 = vmatprep.subr.bf16.mxu0 0
    %1118 = vmatpush2.bf16.msra.mxu0 0
    %1119 = vmatprep.subr.bf16.mxu0 0
    %1120 = vmatpush2.bf16.msra.mxu0 0
    %1121 = vmatprep.subr.bf16.mxu0 0
    %1122 = vmatpush2.bf16.msra.mxu0 0
    %1123 = vmatprep.subr.bf16.mxu0 0
    %1124 = vmatpush2.bf16.msra.mxu0 0
    %1125 = vmatprep.subr.bf16.mxu0 0
    %1126 = vmatpush2.bf16.msra.mxu0 0
    %1127 = vmatprep.subr.bf16.mxu0 0
    %1128 = vmatpush2.bf16.msra.mxu0 0
    %1129 = vmatprep.subr.bf16.mxu0 0
    %1130 = vmatpush2.bf16.msra.mxu0 0
    %1131 = vmatprep.subr.bf16.mxu0 0
    %1132 = vmatpush2.bf16.msra.mxu0 0
    %1133 = vmatprep.mubr.bf16.mxu0 0
    %1134 = vmatmul.mubr.bf16.gmra.mxu0 %v1058
    %v1135 = vpop.f32.mrf.mxu0
    %v1136 = vadd.f32 %v918, %v1135
    %v1137 = vpop.f32.mrf.mxu0
    %v1138 = vadd.f32 %v922, %v1137
    %v1139 = vpop.f32.mrf.mxu0
    %v1140 = vpop.f32.mrf.mxu0
    %1141 = vdwg.mxu0
    %1142 = vmatprep.subr.bf16.mxu0 0
    %1143 = vmatpush1.bf16.msra.mxu0 0
    %1144 = vmatprep.subr.bf16.mxu0 0
    %1145 = vmatpush1.bf16.msra.mxu0 0
    %1146 = vmatprep.subr.bf16.mxu0 0
    %1147 = vmatpush1.bf16.msra.mxu0 0
    %1148 = vmatprep.subr.bf16.mxu0 0
    %1149 = vmatpush1.bf16.msra.mxu0 0
    %1150 = vmatprep.subr.bf16.mxu0 %v1032
    %1151 = vmatpush1.bf16.msra.mxu0 %v1031
    %1152 = vmatprep.subr.bf16.mxu0 %v1026
    %1153 = vmatpush1.bf16.msra.mxu0 %v1025
    %1154 = vmatprep.subr.bf16.mxu0 %v1020
    %1155 = vmatpush1.bf16.msra.mxu0 %v1019
    %1156 = vmatprep.subr.bf16.mxu0 %v1014
    %1157 = vmatpush1.bf16.msra.mxu0 %v1013
    %1158 = vmatprep.subr.bf16.mxu0 0
    %1159 = vmatpush2.bf16.msra.mxu0 0
    %1160 = vmatprep.subr.bf16.mxu0 0
    %1161 = vmatpush2.bf16.msra.mxu0 0
    %1162 = vmatprep.subr.bf16.mxu0 0
    %1163 = vmatpush2.bf16.msra.mxu0 0
    %1164 = vmatprep.subr.bf16.mxu0 0
    %1165 = vmatpush2.bf16.msra.mxu0 0
    %1166 = vmatprep.subr.bf16.mxu0 0
    %1167 = vmatpush2.bf16.msra.mxu0 0
    %1168 = vmatprep.subr.bf16.mxu0 0
    %1169 = vmatpush2.bf16.msra.mxu0 0
    %1170 = vmatprep.subr.bf16.mxu0 0
    %1171 = vmatpush2.bf16.msra.mxu0 0
    %1172 = vmatprep.subr.bf16.mxu0 0
    %1173 = vmatpush2.bf16.msra.mxu0 0
    %1174 = vmatprep.mubr.bf16.mxu0 0
    %1175 = vmatmul.mubr.bf16.gmra.mxu0 %v1058
    %v1176 = vpop.f32.mrf.mxu0
    %v1177 = vadd.f32 %v926, %v1176
    %v1178 = vpop.f32.mrf.mxu0
    %v1179 = vadd.f32 %v930, %v1178
    %v1180 = vpop.f32.mrf.mxu0
    %v1181 = vpop.f32.mrf.mxu0
    %1182 = vdwg.mxu0
    %1184 = vrot.lane.b32.xlu0 %v753, 16
    %v1185 = vpop.permute.xlu0 %1184
    %v1187 = vsel %vm763, %v723, %v742
    %vm1188 = vcmask 130048
    %v1189 = vsel %vm1188, %v1187, %v1185
    %vm1190 = vcmask 195584
    %v1191 = vsel %vm1190, %v1189, 0.0
    %1192 = vst [vmem:[%s14] sm:$0xff] %v1191
    %1193 = vst [vmem:[#allocation2] sm:$0xff] %v1095
    %1194 = vst [vmem:[#allocation2 + $0x8] sm:$0xff] %v1097
    %1195 = vst [vmem:[#allocation2 + $0x10] sm:$0xff] %v1136
    %1196 = vst [vmem:[#allocation2 + $0x18] sm:$0xff] %v1138
    %1197 = vst [vmem:[#allocation2 + $0x20] sm:$0xff] %v1177
    %1198 = vst [vmem:[#allocation2 + $0x28] sm:$0xff] %v1179
    // Predicated region
    $region58: #{vae_forward.1} parent=1 // pred_check
      _
    $region59: #{vae_forward.1} parent=1 // pred_check_branch
      %1200 = sbr.rel (0) target = $region61
    $region60: #{vae_forward.1} parent=1 // pred_region
      _
    $region61: #{vae_forward.1} parent=1 // pred_fallthru
      _
    // Predicated region
    $region62: #{vae_forward.1} parent=1 // pred_check
      _
    $region63: #{vae_forward.1} parent=1 // pred_check_branch
      %1202 = sbr.rel (0) target = $region65
    $region64: #{vae_forward.1} parent=1 // pred_region
      %s1204 = ssub.s32 768, 768
      %1205 = vsyncadd [#allocation3], %s1204
      %s1207 = sshll.u32 [#allocation2], 4
      %s1208 = int_to_ptr.vmem [resolvable:$true] %s1207
      %1210 = dma.vmem_to_hbm [thread:$0]  %s1208, 768, %s15, [#allocation3]
    $region65: #{vae_forward.1} parent=1 // pred_fallthru
      _
    // Predicated region
    $region66: #{vae_forward.1} parent=1 // pred_check
      _
    $region67: #{vae_forward.1} parent=1 // pred_check_branch
      %1212 = sbr.rel (0) target = $region69
    $region68: #{vae_forward.1} parent=1 // pred_region
      _
    $region69: #{vae_forward.1} parent=1 // pred_fallthru
      _
    // Predicated region
    $region70: #{vae_forward.1} parent=1 // pred_check
      _
    $region71: #{vae_forward.1} parent=1 // pred_check_branch
      %1214 = sbr.rel (0) target = $region73
    $region72: #{vae_forward.1} parent=1 // pred_region
      %1215 = dma.done [#allocation3], 768
    $region73: #{vae_forward.1} parent=1 // pred_fallthru
      _
    %1216 = vsyncpa [#allocation3], 1

</llo_original>
